<compile_context>
chip_gen: v6e
topology: v6e:2x2x1
jax: 0.10.0
libtpu: 0.0.40
codegen_flags: <defaults>
</compile_context>

<pallas_src>
import jax
import jax.numpy as jnp
from jax.experimental import pallas as pl
from jax.experimental.pallas import tpu as pltpu


def _compress_ch(in_channels, reduction):
    compression = in_channels // reduction
    if compression < 2:
        compression = 2
    return compression


# ------------------------------ kernels ------------------------------------


def _scse_whole_kernel(x_ref, w1t_ref, b1_ref, w2_ref, b2_ref, ws_ref, bs_ref, o_ref):
    """Single-read path: one (C, HW) block per batch element, pooling + MLP in-kernel."""
    x = x_ref[...].astype(jnp.float32)                                # (C, HW)

    # cSE squeeze: per-channel spatial sum.  1/HW (true, unpadded HW) is folded into
    # w1t by the wrapper; padded tail columns are zeros so the sum is exact.
    xsum = jnp.sum(x, axis=1, keepdims=True)                          # (C, 1)

    # Tiny excitation MLP as VPU broadcast-multiplies + small reductions (no MXU).
    z = jnp.maximum(
        jnp.sum(w1t_ref[...] * xsum, axis=0, keepdims=True) + b1_ref[...], 0.0)   # (1, comp)
    s = jax.nn.sigmoid(
        jnp.sum(w2_ref[...] * z, axis=1, keepdims=True) + b2_ref[...])            # (C, 1)

    # sSE with the channel scale folded into the spatial weight: Ws@(x*s) == (Ws*s)@x,
    # so the (C, HW) `cse` tile never has to be materialized before the reduction.
    ws_eff = ws_ref[...] * s                                          # (C, 1)
    a = jax.nn.sigmoid(
        jnp.sum(ws_eff * x, axis=0, keepdims=True) + bs_ref[...])     # (1, HW)

    cse = x * s
    o_ref[...] = jnp.maximum(cse, x * a).astype(o_ref.dtype)


def _scse_tiled_kernel(x_ref, s_ref, ws_ref, bs_ref, o_ref):
    """HW-tiled path: channel scale s precomputed outside; kernel streams (C, T) tiles."""
    x = x_ref[...].astype(jnp.float32)                                # (C, T)
    s = s_ref[...]                                                    # (C, 1)  f32
    ws_eff = ws_ref[...] * s                                          # (C, 1)
    a = jax.nn.sigmoid(
        jnp.sum(ws_eff * x, axis=0, keepdims=True) + bs_ref[...])     # (1, T)
    cse = x * s
    o_ref[...] = jnp.maximum(cse, x * a).astype(o_ref.dtype)


# ------------------------------ wrapper helpers ------------------------------


def _cdiv(a, b):
    return -(-a // b)


def _round_up(v, m):
    return ((v + m - 1) // m) * m


def _vmem_budgets():
    """Generation-aware VMEM sizing (v5e/v6e: 128 MiB per TC; v7x: 64 MiB per TC)."""
    cap = 64 * 1024 * 1024                 # conservative fallback = v7x per-TC VMEM
    try:
        cap = int(pltpu.get_tpu_info().vmem_capacity_bytes)
    except Exception:                      # query unavailable: keep conservative default
        pass
    budget = (cap * 11) // 20              # ~0.55x: pipeline buffers + in-kernel temps
    limit = (cap * 3) // 4                 # ~0.75x: explicit scoped-VMEM limit for Mosaic
    return budget, limit


def _pick_hw_tile(C, hw_pad128, budget_bytes, max_hw_tile, elem_bytes, nbuf_in):
    """Pick a lane-dense tile width T (multiple of 128) and the padded HW it tiles.

    Returns (T, hw_final) with hw_final % T == 0 and hw_final >= hw_pad128.
    """
    # Per grid step footprint ~ nbuf_in x in-tile + 2 x out-tile + ~2 f32 working temps.
    per_elem = nbuf_in * elem_bytes + 2 * elem_bytes + 2 * 4
    max_t = budget_bytes // (per_elem * C)
    max_t = max(128, (max_t // 128) * 128)   # 128 is the lane-width floor (huge-C shapes)
    t_cap = max(128, min(max_hw_tile, max_t))
    t_cap = (t_cap // 128) * 128
    if hw_pad128 <= t_cap:
        return hw_pad128, hw_pad128          # single tile per batch row
    # Prefer the largest T <= t_cap with T >= 512 that evenly divides hw_pad128
    # (zero extra padding, and T never collapses to 128 where per-step overhead wins).
    t = t_cap
    while t >= 512:
        if hw_pad128 % t == 0:
            return t, hw_pad128
        t -= 128
    # No good divisor: keep T near t_cap and pad HW up to a multiple of T instead.
    nt = _cdiv(hw_pad128, t_cap)
    t = min(t_cap, _round_up(_cdiv(hw_pad128, nt), 128))
    return t, nt * t


# ------------------------------ wrapper -------------------------------------


def scse_pallas(x, w1, b1, w2, b2, ws, bs, *, force_tiled=False,
                max_hw_tile=2048, x_buffer_count=2):
    """SCSE forward.

    x: (N, C, H, W), f32 or bf16.  w1: (comp, C), b1: (comp,), w2: (C, comp),
    b2: (C,), ws: (1, C), bs: (1,).  Returns (N, C, H, W) with x's dtype.
    """
    N, C, H, W = x.shape
    HW = H * W
    comp = w1.shape[0]
    x_dtype = x.dtype
    elem_bytes = jnp.dtype(x_dtype).itemsize

    budget, vmem_limit = _vmem_budgets()

    # Lane-dense last dim: always pad HW up to a multiple of 128 (zero pad; the
    # padded tail contributes nothing to the channel sum and is sliced off below).
    hw_pad = _round_up(HW, 128)

    f32 = jnp.float32
    x_flat = x.reshape(N, C, HW)
    w1 = w1.astype(f32); b1 = b1.astype(f32); w2 = w2.astype(f32)
    b2 = b2.astype(f32); ws = ws.astype(f32); bs = bs.astype(f32)
    ws_col = ws.reshape(C, 1)
    bs_2d = bs.reshape(1, 1)

    # Whole-block footprint: 2x in + 2x out pipeline buffers plus ~3 block-sized f32
    # working temps (cast copy / cse / gated x) of Mosaic scratch headroom.
    whole_footprint = C * hw_pad * (2 * elem_bytes + 2 * elem_bytes + 3 * 4)
    use_tiled = force_tiled or (whole_footprint > budget)
    # TODO(synk): on v7x a single-step whole-path grid (N == 1) runs on one TensorCore
    # with no DMA/compute overlap; an HW-chunked two-pass emit_pipeline variant would
    # help compute-bound cases, but this kernel is HBM-bound so the win is marginal.

    if not use_tiled:
        # ---- single-read path: pooling + MLP + both gates inside the kernel ----
        x_in = x_flat if hw_pad == HW else jnp.pad(
            x_flat, ((0, 0), (0, 0), (0, hw_pad - HW)))
        w1t_eff = (w1 / float(HW)).T                 # (C, comp), 1/HW (true HW) folded in
        b1_row = b1.reshape(1, comp)
        b2_col = b2.reshape(C, 1)

        out_flat = pl.pallas_call(
            _scse_whole_kernel,
            out_shape=jax.ShapeDtypeStruct((N, C, hw_pad), x_dtype),
            grid_spec=pltpu.PrefetchScalarGridSpec(
                num_scalar_prefetch=0,
                grid=(N,),
                in_specs=[
                    pl.BlockSpec((None, C, hw_pad), lambda n: (n, 0, 0)),  # x
                    pl.BlockSpec((C, comp), lambda n: (0, 0)),             # w1t (pre-scaled)
                    pl.BlockSpec((1, comp), lambda n: (0, 0)),             # b1
                    pl.BlockSpec((C, comp), lambda n: (0, 0)),             # w2
                    pl.BlockSpec((C, 1), lambda n: (0, 0)),                # b2
                    pl.BlockSpec((C, 1), lambda n: (0, 0)),                # ws (column)
                    pl.BlockSpec((1, 1), lambda n: (0, 0)),                # bs
                ],
                out_specs=pl.BlockSpec((None, C, hw_pad), lambda n: (n, 0, 0)),
            ),
            compiler_params=pltpu.CompilerParams(
                dimension_semantics=("parallel",),
                vmem_limit_bytes=vmem_limit,
            ),
        )(x_in, w1t_eff, b1_row, w2, b2_col, ws_col, bs_2d)

    else:
        # ---- HW-tiled path: tiny channel scale precomputed by XLA (global avg-pool
        #      + two tiny matvecs on (N, C) data, precision=highest for cross-path
        #      consistency), kernel streams lane-dense (C, T) tiles.
        #      grid = (N, HW_final // T); both axes independent -> fully "parallel". ----
        xsum = jnp.sum(x_flat.astype(f32), axis=2)                       # (N, C)
        mean = xsum * (1.0 / float(HW))                                  # true-HW mean
        hi = jax.lax.Precision.HIGHEST
        z = jnp.maximum(jnp.dot(mean, w1.T, precision=hi) + b1, 0.0)     # (N, comp)
        s_all = jax.nn.sigmoid(
            jnp.dot(z, w2.T, precision=hi) + b2)[:, :, None]             # (N, C, 1) f32

        T, hw_final = _pick_hw_tile(C, hw_pad, budget, max_hw_tile,
                                    elem_bytes, max(2, x_buffer_count))
        x_in = x_flat if hw_final == HW else jnp.pad(
            x_flat, ((0, 0), (0, 0), (0, hw_final - HW)))

        x_spec_kwargs = {}
        if x_buffer_count > 2:
            # Optional deeper buffering to hide DMA jitter on large-C streams; sweep.
            x_spec_kwargs["pipeline_mode"] = pl.Buffered(x_buffer_count)

        out_flat = pl.pallas_call(
            _scse_tiled_kernel,
            out_shape=jax.ShapeDtypeStruct((N, C, hw_final), x_dtype),
            grid_spec=pltpu.PrefetchScalarGridSpec(
                num_scalar_prefetch=0,
                grid=(N, hw_final // T),
                in_specs=[
                    pl.BlockSpec((None, C, T), lambda n, t: (n, 0, t),
                                 **x_spec_kwargs),                        # x tile
                    pl.BlockSpec((None, C, 1), lambda n, t: (n, 0, 0)),   # s (per batch)
                    pl.BlockSpec((C, 1), lambda n, t: (0, 0)),            # ws (column)
                    pl.BlockSpec((1, 1), lambda n, t: (0, 0)),            # bs
                ],
                out_specs=pl.BlockSpec((None, C, T), lambda n, t: (n, 0, t)),
            ),
            compiler_params=pltpu.CompilerParams(
                dimension_semantics=("parallel", "parallel"),
                vmem_limit_bytes=vmem_limit,
            ),
        )(x_in, s_all, ws_col, bs_2d)

    out_flat = out_flat[:, :, :HW]
    return out_flat.reshape(N, C, H, W)


# ------------------------------ reference -----------------------------------


def scse_reference(x, w1, b1, w2, b2, ws, bs):
    """Pure-JAX reference matching the PyTorch forward exactly."""
    mean = x.mean(axis=(2, 3))                                      # (N, C)
    z = jnp.maximum(mean @ w1.T + b1, 0.0)                          # (N, comp)
    s = jax.nn.sigmoid(z @ w2.T + b2)                               # (N, C)
    cse = x * s[:, :, None, None]
    a = jax.nn.sigmoid(
        jnp.einsum("nchw,c->nhw", cse, ws.reshape(-1)) + bs.reshape(()))
    sse = x * a[:, None, :, :]
    return jnp.maximum(cse, sse)


if __name__ == "__main__":
    N, C, H, W = 2, 4, 16, 16
    reduction = 16
    comp = _compress_ch(C, reduction)   # -> 2

    key = jax.random.PRNGKey(0)
    kx, k1, k2, k3, k4, k5, k6 = jax.random.split(key, 7)

    x = jax.random.normal(kx, (N, C, H, W), dtype=jnp.float32)

    # Parameter shapes mirror the PyTorch module's 1x1 convs (kernel dims squeezed).
    w1 = jax.random.normal(k1, (comp, C), dtype=jnp.float32) * 0.5   # Conv2d(C -> comp)
    b1 = jax.random.normal(k2, (comp,), dtype=jnp.float32) * 0.1
    w2 = jax.random.normal(k3, (C, comp), dtype=jnp.float32) * 0.5   # Conv2d(comp -> C)
    b2 = jax.random.normal(k4, (C,), dtype=jnp.float32) * 0.1
    ws = jax.random.normal(k5, (1, C), dtype=jnp.float32) * 0.5      # Conv2d(C -> 1)
    bs = jax.random.normal(k6, (1,), dtype=jnp.float32) * 0.1

    ref = scse_reference(x, w1, b1, w2, b2, ws, bs)

    # Path 1: single-read whole-(C, HW) block per batch (auto-selected: fits VMEM).
    out_whole = jax.block_until_ready(scse_pallas(x, w1, b1, w2, b2, ws, bs))
    assert out_whole.shape == (N, C, H, W)
    assert jnp.allclose(out_whole, ref, atol=1e-5, rtol=1e-5), "whole-block path mismatch"

    # Path 2: HW-tiled streaming path with precomputed channel scale (forced; grid=(2, 2)).
    out_tiled = jax.block_until_ready(
        scse_pallas(x, w1, b1, w2, b2, ws, bs, force_tiled=True, max_hw_tile=128))
    assert jnp.allclose(out_tiled, ref, atol=1e-5, rtol=1e-5), "tiled path mismatch"

    # Path 3: non-128-multiple spatial size (14x14 -> HW=196, padded to 256) on both paths.
    x2 = jax.random.normal(kx, (N, C, 14, 14), dtype=jnp.float32)
    ref2 = scse_reference(x2, w1, b1, w2, b2, ws, bs)
    out2_whole = jax.block_until_ready(scse_pallas(x2, w1, b1, w2, b2, ws, bs))
    assert jnp.allclose(out2_whole, ref2, atol=1e-5, rtol=1e-5), "padded whole path mismatch"
    out2_tiled = jax.block_until_ready(
        scse_pallas(x2, w1, b1, w2, b2, ws, bs, force_tiled=True, max_hw_tile=128))
    assert jnp.allclose(out2_tiled, ref2, atol=1e-5, rtol=1e-5), "padded tiled path mismatch"

    # Path 4: bf16 activations (HBM-bound kernel -> ~2x traffic saving), f32 MLP inside.
    xb = x.astype(jnp.bfloat16)
    refb = scse_reference(xb.astype(jnp.float32), w1, b1, w2, b2, ws, bs)
    out_b = jax.block_until_ready(scse_pallas(xb, w1, b1, w2, b2, ws, bs))
    assert out_b.dtype == jnp.bfloat16
    assert jnp.allclose(out_b.astype(jnp.float32), refb, atol=3e-2, rtol=3e-2), \
        "bf16 path mismatch"

    print("KERNEL_OK")
</pallas_src>

<mosaic_0001>
module attributes {stable_mosaic.version = 11 : i64} {
  func.func @_scse_whole_kernel(%arg0: i32, %arg1: memref<1x4x256xf32, #tpu.memory_space<vmem>>, %arg2: memref<4x2xf32, #tpu.memory_space<vmem>>, %arg3: memref<1x2xf32, #tpu.memory_space<vmem>>, %arg4: memref<4x2xf32, #tpu.memory_space<vmem>>, %arg5: memref<4x1xf32, #tpu.memory_space<vmem>>, %arg6: memref<4x1xf32, #tpu.memory_space<vmem>>, %arg7: memref<1x1xf32, #tpu.memory_space<vmem>>, %arg8: memref<1x4x256xf32, #tpu.memory_space<vmem>>) attributes {dimension_semantics = [#tpu.dimension_semantics<parallel>], iteration_bounds = array<i64: 2>, scalar_prefetch = 0 : i64, scratch_operands = 0 : i64, tpu.core_type = #tpu.core_type<tc>, window_params = [{transform_indices = @transform_0, window_bounds = array<i64: 1, 4, 256>}, {pipeline_mode = #tpu.pipeline_mode<synchronous>, transform_indices = @transform_1, window_bounds = array<i64: 4, 2>}, {pipeline_mode = #tpu.pipeline_mode<synchronous>, transform_indices = @transform_2, window_bounds = array<i64: 1, 2>}, {pipeline_mode = #tpu.pipeline_mode<synchronous>, transform_indices = @transform_3, window_bounds = array<i64: 4, 2>}, {pipeline_mode = #tpu.pipeline_mode<synchronous>, transform_indices = @transform_4, window_bounds = array<i64: 4, 1>}, {pipeline_mode = #tpu.pipeline_mode<synchronous>, transform_indices = @transform_5, window_bounds = array<i64: 4, 1>}, {pipeline_mode = #tpu.pipeline_mode<synchronous>, transform_indices = @transform_6, window_bounds = array<i64: 1, 1>}, {transform_indices = @transform_7, window_bounds = array<i64: 1, 4, 256>}]} {
    %c0 = arith.constant 0 : index
    %c0_0 = arith.constant 0 : index
    %c0_1 = arith.constant 0 : index
    %0 = vector.load %arg1[%c0, %c0_0, %c0_1] : memref<1x4x256xf32, #tpu.memory_space<vmem>>, vector<1x4x256xf32>
    %1 = vector.shape_cast %0 : vector<1x4x256xf32> to vector<4x256xf32>
    %cst = arith.constant dense<0.000000e+00> : vector<4xf32>
    %2 = vector.multi_reduction <add>, %1, %cst [1] : vector<4x256xf32> to vector<4xf32>
    %3 = vector.shape_cast %2 : vector<4xf32> to vector<4x1xf32>
    %c0_2 = arith.constant 0 : index
    %c0_3 = arith.constant 0 : index
    %4 = vector.load %arg2[%c0_2, %c0_3] : memref<4x2xf32, #tpu.memory_space<vmem>>, vector<4x2xf32>
    %5 = vector.broadcast %3 : vector<4x1xf32> to vector<4x2xf32>
    %6 = arith.mulf %4, %5 : vector<4x2xf32>
    %cst_4 = arith.constant dense<0.000000e+00> : vector<2xf32>
    %7 = vector.multi_reduction <add>, %6, %cst_4 [0] : vector<4x2xf32> to vector<2xf32>
    %8 = vector.shape_cast %7 : vector<2xf32> to vector<1x2xf32>
    %c0_5 = arith.constant 0 : index
    %c0_6 = arith.constant 0 : index
    %9 = vector.load %arg3[%c0_5, %c0_6] : memref<1x2xf32, #tpu.memory_space<vmem>>, vector<1x2xf32>
    %10 = arith.addf %8, %9 : vector<1x2xf32>
    %cst_7 = arith.constant 0.000000e+00 : f32
    %11 = vector.broadcast %cst_7 : f32 to vector<1x2xf32>
    %12 = arith.maximumf %10, %11 : vector<1x2xf32>
    %c0_8 = arith.constant 0 : index
    %c0_9 = arith.constant 0 : index
    %13 = vector.load %arg4[%c0_8, %c0_9] : memref<4x2xf32, #tpu.memory_space<vmem>>, vector<4x2xf32>
    %14 = vector.broadcast %12 : vector<1x2xf32> to vector<4x2xf32>
    %15 = arith.mulf %13, %14 : vector<4x2xf32>
    %cst_10 = arith.constant dense<0.000000e+00> : vector<4xf32>
    %16 = vector.multi_reduction <add>, %15, %cst_10 [1] : vector<4x2xf32> to vector<4xf32>
    %17 = vector.shape_cast %16 : vector<4xf32> to vector<4x1xf32>
    %c0_11 = arith.constant 0 : index
    %c0_12 = arith.constant 0 : index
    %18 = vector.load %arg5[%c0_11, %c0_12] : memref<4x1xf32, #tpu.memory_space<vmem>>, vector<4x1xf32>
    %19 = arith.addf %17, %18 : vector<4x1xf32>
    %20 = arith.negf %19 : vector<4x1xf32>
    %21 = math.exp %20 : vector<4x1xf32>
    %cst_13 = arith.constant 1.000000e+00 : f32
    %22 = vector.broadcast %cst_13 : f32 to vector<4x1xf32>
    %23 = arith.addf %22, %21 : vector<4x1xf32>
    %24 = arith.divf %22, %23 : vector<4x1xf32>
    %c0_14 = arith.constant 0 : index
    %c0_15 = arith.constant 0 : index
    %25 = vector.load %arg6[%c0_14, %c0_15] : memref<4x1xf32, #tpu.memory_space<vmem>>, vector<4x1xf32>
    %26 = arith.mulf %25, %24 : vector<4x1xf32>
    %27 = vector.broadcast %26 : vector<4x1xf32> to vector<4x256xf32>
    %28 = arith.mulf %27, %1 : vector<4x256xf32>
    %cst_16 = arith.constant dense<0.000000e+00> : vector<256xf32>
    %29 = vector.multi_reduction <add>, %28, %cst_16 [0] : vector<4x256xf32> to vector<256xf32>
    %30 = vector.shape_cast %29 : vector<256xf32> to vector<1x256xf32>
    %c0_17 = arith.constant 0 : index
    %c0_18 = arith.constant 0 : index
    %31 = vector.load %arg7[%c0_17, %c0_18] : memref<1x1xf32, #tpu.memory_space<vmem>>, vector<1x1xf32>
    %32 = vector.broadcast %31 : vector<1x1xf32> to vector<1x256xf32>
    %33 = arith.addf %30, %32 : vector<1x256xf32>
    %34 = arith.negf %33 : vector<1x256xf32>
    %35 = math.exp %34 : vector<1x256xf32>
    %cst_19 = arith.constant 1.000000e+00 : f32
    %36 = vector.broadcast %cst_19 : f32 to vector<1x256xf32>
    %37 = arith.addf %36, %35 : vector<1x256xf32>
    %38 = arith.divf %36, %37 : vector<1x256xf32>
    %39 = vector.broadcast %24 : vector<4x1xf32> to vector<4x256xf32>
    %40 = arith.mulf %1, %39 : vector<4x256xf32>
    %41 = vector.broadcast %38 : vector<1x256xf32> to vector<4x256xf32>
    %42 = arith.mulf %1, %41 : vector<4x256xf32>
    %43 = arith.maximumf %40, %42 : vector<4x256xf32>
    %c0_20 = arith.constant 0 : index
    %c0_21 = arith.constant 0 : index
    %c0_22 = arith.constant 0 : index
    %44 = vector.load %arg8[%c0_20, %c0_21, %c0_22] : memref<1x4x256xf32, #tpu.memory_space<vmem>>, vector<1x4x256xf32>
    %45 = vector.shape_cast %44 : vector<1x4x256xf32> to vector<4x256xf32>
    %46 = vector.shape_cast %43 : vector<4x256xf32> to vector<1x4x256xf32>
    tpu.vector_store %arg8[%c0_20, %c0_21, %c0_22], %46 {strides = array<i32>} : memref<1x4x256xf32, #tpu.memory_space<vmem>>, vector<1x4x256xf32>,
    return
  }
  func.func @transform_0(%arg0: i32) -> (i32, i32, i32) {
    %c0_i32 = arith.constant 0 : i32
    %c0_i32_0 = arith.constant 0 : i32
    %c0_i32_1 = arith.constant 0 : i32
    return %arg0, %c0_i32, %c0_i32_0 : i32, i32, i32
  }
  func.func @transform_1(%arg0: i32) -> (i32, i32) {
    %c0_i32 = arith.constant 0 : i32
    %c0_i32_0 = arith.constant 0 : i32
    %c0_i32_1 = arith.constant 0 : i32
    return %c0_i32, %c0_i32_0 : i32, i32
  }
  func.func @transform_2(%arg0: i32) -> (i32, i32) {
    %c0_i32 = arith.constant 0 : i32
    %c0_i32_0 = arith.constant 0 : i32
    %c0_i32_1 = arith.constant 0 : i32
    return %c0_i32, %c0_i32_0 : i32, i32
  }
  func.func @transform_3(%arg0: i32) -> (i32, i32) {
    %c0_i32 = arith.constant 0 : i32
    %c0_i32_0 = arith.constant 0 : i32
    %c0_i32_1 = arith.constant 0 : i32
    return %c0_i32, %c0_i32_0 : i32, i32
  }
  func.func @transform_4(%arg0: i32) -> (i32, i32) {
    %c0_i32 = arith.constant 0 : i32
    %c0_i32_0 = arith.constant 0 : i32
    %c0_i32_1 = arith.constant 0 : i32
    return %c0_i32, %c0_i32_0 : i32, i32
  }
  func.func @transform_5(%arg0: i32) -> (i32, i32) {
    %c0_i32 = arith.constant 0 : i32
    %c0_i32_0 = arith.constant 0 : i32
    %c0_i32_1 = arith.constant 0 : i32
    return %c0_i32, %c0_i32_0 : i32, i32
  }
  func.func @transform_6(%arg0: i32) -> (i32, i32) {
    %c0_i32 = arith.constant 0 : i32
    %c0_i32_0 = arith.constant 0 : i32
    %c0_i32_1 = arith.constant 0 : i32
    return %c0_i32, %c0_i32_0 : i32, i32
  }
  func.func @transform_7(%arg0: i32) -> (i32, i32, i32) {
    %c0_i32 = arith.constant 0 : i32
    %c0_i32_0 = arith.constant 0 : i32
    %c0_i32_1 = arith.constant 0 : i32
    return %arg0, %c0_i32, %c0_i32_0 : i32, i32, i32
  }
}

</mosaic_0001>

<llo_original>
// kernel: tpu_custom_call.1
$region0: #{tpu_custom_call.1}
  #allocation0 [shape = 'u32[]', space=smem, size = 0x4, offset = 0x4, fixed_abs, tag = 'smem constant byte address 0x4 - core index']
  #allocation1 [shape = 'u32[144,128]{1,0:T(1,128)}', space=vmem, size = 0x12000, scoped, tag = 'internal scratch']
  #allocation2 [shape = 'f32[1,1]{1,0:T(1,128)S(1)}', space=vmem, size = 0x200, scoped, tag = 'scoped memory for tpu_custom_call.1']
  %s0 = inlined_call_operand.vmem [shape: f32[2,4,256], index: 0, kind: input, shape index: {}]
  %s1 = inlined_call_operand.vmem [shape: f32[4,2], index: 1, kind: input, shape index: {}]
  %s2 = inlined_call_operand.vmem [shape: f32[1,2], index: 2, kind: input, shape index: {}]
  %s3 = inlined_call_operand.vmem [shape: f32[4,2], index: 3, kind: input, shape index: {}]
  %s4 = inlined_call_operand.vmem [shape: f32[4,1], index: 4, kind: input, shape index: {}]
  %s5 = inlined_call_operand.vmem [shape: f32[4,1], index: 5, kind: input, shape index: {}]
  %s6 = inlined_call_operand.<no memory space> [shape: f32[1,1], index: 6, kind: input, shape index: {}]
  %s7 = inlined_call_operand.hbm [shape: f32[2,4,256], index: 7, kind: output, shape index: {}]
  %s8 = sld [smem:[#allocation0]]
  $region61: #{tpu_custom_call.1} parent=0
    _
  %s10 = ssub.s32 1, %s8
  %s11 = scalar_select 0, %s10, %s8
  %v12 = vstv %s6
  %13 = vst [vmem:[#allocation2] sm:$0x1] %v12
  $region1: #{tpu_custom_call.1} parent=0
    #allocation3 [shape = 'u8[8192]{0}', space=vmem, size = 0x2000, scoped, tag = 'output window, operand 0']
    #allocation4 [shape = 's32[2]{0}', space=sflag, size = 0x8, scoped, tag = 'scoped memory for tpu_custom_call.1']
    %14 = vsyncpa [#allocation4], 0
    %s15 = scalar_lea.sflag [#allocation4], 1
    %16 = vsyncpa %s15, 0
    loop: start=0, step=1, limit=4
    $region2: #{tpu_custom_call.1} parent=1 // loop_pre_header
      _
    $region3: #{tpu_custom_call.1} parent=1 // loop_header
      %s18 = sphi 0, %s22
      %p19 = scmp.ge.s32.totalorder %s18, 4
      %s28 = sphi 0, %s30
      %s31 = sphi 0, %s28
      %s32 = sphi 0, %s31
      %s48 = sphi 0, %s32
      %s52 = sphi 0, %s52
      %s54 = sphi 0, %s52
      %s55 = sphi 0, %s54
      %s69 = sphi 0, %s55
      %s73 = sphi 0, %s73
      %s75 = sphi 0, %s73
      %s76 = sphi 0, %s75
      %s90 = sphi 0, %s76
      %s94 = sphi 0, %s94
      %s96 = sphi 0, %s94
      %s97 = sphi 0, %s96
      %s111 = sphi 0, %s97
      %s115 = sphi 0, %s115
      %s117 = sphi 0, %s115
      %s118 = sphi 0, %s117
      %s132 = sphi 0, %s118
      %s136 = sphi 0, %s136
      %s138 = sphi 0, %s136
      %s139 = sphi 0, %s138
      %s153 = sphi 0, %s139
      %s157 = sphi 0, %s157
      %s159 = sphi 0, %s157
      %s160 = sphi 0, %s159
      %s174 = sphi 0, %s160
      %s180 = sphi 0, %s182
      %s183 = sphi 0, %s180
      %s184 = sphi 0, %s183
      %s200 = sphi 0, %s184
    $region4: #{tpu_custom_call.1} parent=1 // loop_header_branch
      %21 = sbr.rel (%p19) target = $region8
    $region5: #{tpu_custom_call.1} parent=1 // loop_body
      %s23 = ssub.s32 %s18, 1
      %s24 = ssub.s32 %s18, 2
      %s25 = sadd.s32 %s18, 1
      %s26 = ssub.s32 %s18, %s25
      %p27 = scmp.eq.s32.totalorder %s26, 0
      %s29 = sadd.s32 %s28, 1
      %s30 = scalar_select %p27, %s28, %s29
      %p33 = pneg %p27
      %p34 = scmp.eq.s32.totalorder %s18, 1
      %p35 = por %p33, %p34
      %p36 = scmp.ne.s32.totalorder %s28, %s31
      %p37 = scmp.eq.s32.totalorder %s18, 0
      %p38 = por %p36, %p37
      %p39 = scmp.ne.s32.totalorder %s28, %s31
      %p40 = scmp.eq.s32.totalorder %s23, 1
      %p41 = por %p39, %p40
      %p42 = scmp.ne.s32.totalorder %s31, %s32
      %p43 = scmp.eq.s32.totalorder %s23, 0
      %p44 = por %p42, %p43
      %p45 = scmp.ne.s32.totalorder %s31, %s32
      %p46 = scmp.eq.s32.totalorder %s24, 1
      %p47 = por %p45, %p46
      %p49 = scmp.ne.s32.totalorder %s32, %s48
      %p50 = scmp.eq.s32.totalorder %s24, 0
      %p51 = por %p49, %p50
      %s53 = sadd.s32 %s52, 1
      %p56 = scmp.eq.s32.totalorder %s18, 1
      %p57 = scmp.ne.s32.totalorder %s52, %s54
      %p58 = scmp.eq.s32.totalorder %s18, 0
      %p59 = por %p57, %p58
      %p60 = scmp.ne.s32.totalorder %s52, %s54
      %p61 = scmp.eq.s32.totalorder %s23, 1
      %p62 = por %p60, %p61
      %p63 = scmp.ne.s32.totalorder %s54, %s55
      %p64 = scmp.eq.s32.totalorder %s23, 0
      %p65 = por %p63, %p64
      %p66 = scmp.ne.s32.totalorder %s54, %s55
      %p67 = scmp.eq.s32.totalorder %s24, 1
      %p68 = por %p66, %p67
      %p70 = scmp.ne.s32.totalorder %s55, %s69
      %p71 = scmp.eq.s32.totalorder %s24, 0
      %p72 = por %p70, %p71
      %s74 = sadd.s32 %s73, 1
      %p77 = scmp.eq.s32.totalorder %s18, 1
      %p78 = scmp.ne.s32.totalorder %s73, %s75
      %p79 = scmp.eq.s32.totalorder %s18, 0
      %p80 = por %p78, %p79
      %p81 = scmp.ne.s32.totalorder %s73, %s75
      %p82 = scmp.eq.s32.totalorder %s23, 1
      %p83 = por %p81, %p82
      %p84 = scmp.ne.s32.totalorder %s75, %s76
      %p85 = scmp.eq.s32.totalorder %s23, 0
      %p86 = por %p84, %p85
      %p87 = scmp.ne.s32.totalorder %s75, %s76
      %p88 = scmp.eq.s32.totalorder %s24, 1
      %p89 = por %p87, %p88
      %p91 = scmp.ne.s32.totalorder %s76, %s90
      %p92 = scmp.eq.s32.totalorder %s24, 0
      %p93 = por %p91, %p92
      %s95 = sadd.s32 %s94, 1
      %p98 = scmp.eq.s32.totalorder %s18, 1
      %p99 = scmp.ne.s32.totalorder %s94, %s96
      %p100 = scmp.eq.s32.totalorder %s18, 0
      %p101 = por %p99, %p100
      %p102 = scmp.ne.s32.totalorder %s94, %s96
      %p103 = scmp.eq.s32.totalorder %s23, 1
      %p104 = por %p102, %p103
      %p105 = scmp.ne.s32.totalorder %s96, %s97
      %p106 = scmp.eq.s32.totalorder %s23, 0
      %p107 = por %p105, %p106
      %p108 = scmp.ne.s32.totalorder %s96, %s97
      %p109 = scmp.eq.s32.totalorder %s24, 1
      %p110 = por %p108, %p109
      %p112 = scmp.ne.s32.totalorder %s97, %s111
      %p113 = scmp.eq.s32.totalorder %s24, 0
      %p114 = por %p112, %p113
      %s116 = sadd.s32 %s115, 1
      %p119 = scmp.eq.s32.totalorder %s18, 1
      %p120 = scmp.ne.s32.totalorder %s115, %s117
      %p121 = scmp.eq.s32.totalorder %s18, 0
      %p122 = por %p120, %p121
      %p123 = scmp.ne.s32.totalorder %s115, %s117
      %p124 = scmp.eq.s32.totalorder %s23, 1
      %p125 = por %p123, %p124
      %p126 = scmp.ne.s32.totalorder %s117, %s118
      %p127 = scmp.eq.s32.totalorder %s23, 0
      %p128 = por %p126, %p127
      %p129 = scmp.ne.s32.totalorder %s117, %s118
      %p130 = scmp.eq.s32.totalorder %s24, 1
      %p131 = por %p129, %p130
      %p133 = scmp.ne.s32.totalorder %s118, %s132
      %p134 = scmp.eq.s32.totalorder %s24, 0
      %p135 = por %p133, %p134
      %s137 = sadd.s32 %s136, 1
      %p140 = scmp.eq.s32.totalorder %s18, 1
      %p141 = scmp.ne.s32.totalorder %s136, %s138
      %p142 = scmp.eq.s32.totalorder %s18, 0
      %p143 = por %p141, %p142
      %p144 = scmp.ne.s32.totalorder %s136, %s138
      %p145 = scmp.eq.s32.totalorder %s23, 1
      %p146 = por %p144, %p145
      %p147 = scmp.ne.s32.totalorder %s138, %s139
      %p148 = scmp.eq.s32.totalorder %s23, 0
      %p149 = por %p147, %p148
      %p150 = scmp.ne.s32.totalorder %s138, %s139
      %p151 = scmp.eq.s32.totalorder %s24, 1
      %p152 = por %p150, %p151
      %p154 = scmp.ne.s32.totalorder %s139, %s153
      %p155 = scmp.eq.s32.totalorder %s24, 0
      %p156 = por %p154, %p155
      %s158 = sadd.s32 %s157, 1
      %p161 = scmp.eq.s32.totalorder %s18, 1
      %p162 = scmp.ne.s32.totalorder %s157, %s159
      %p163 = scmp.eq.s32.totalorder %s18, 0
      %p164 = por %p162, %p163
      %p165 = scmp.ne.s32.totalorder %s157, %s159
      %p166 = scmp.eq.s32.totalorder %s23, 1
      %p167 = por %p165, %p166
      %p168 = scmp.ne.s32.totalorder %s159, %s160
      %p169 = scmp.eq.s32.totalorder %s23, 0
      %p170 = por %p168, %p169
      %p171 = scmp.ne.s32.totalorder %s159, %s160
      %p172 = scmp.eq.s32.totalorder %s24, 1
      %p173 = por %p171, %p172
      %p175 = scmp.ne.s32.totalorder %s160, %s174
      %p176 = scmp.eq.s32.totalorder %s24, 0
      %p177 = por %p175, %p176
      %s178 = ssub.s32 %s18, %s25
      %p179 = scmp.eq.s32.totalorder %s178, 0
      %s181 = sadd.s32 %s180, 1
      %s182 = scalar_select %p179, %s180, %s181
      %p185 = pneg %p179
      %p186 = scmp.eq.s32.totalorder %s18, 1
      %p187 = por %p185, %p186
      %p188 = scmp.ne.s32.totalorder %s180, %s183
      %p189 = scmp.eq.s32.totalorder %s18, 0
      %p190 = por %p188, %p189
      %p191 = scmp.ne.s32.totalorder %s180, %s183
      %p192 = scmp.eq.s32.totalorder %s23, 1
      %p193 = por %p191, %p192
      %p194 = scmp.ne.s32.totalorder %s183, %s184
      %p195 = scmp.eq.s32.totalorder %s23, 0
      %p196 = por %p194, %p195
      %p197 = scmp.ne.s32.totalorder %s183, %s184
      %p198 = scmp.eq.s32.totalorder %s24, 1
      %p199 = por %p197, %p198
      %p201 = scmp.ne.s32.totalorder %s184, %s200
      %p202 = scmp.eq.s32.totalorder %s24, 0
      %p203 = por %p201, %p202
      %p204 = scmp.le.s32.totalorder 1, %s18
      %p205 = scmp.lt.s32.totalorder %s18, 3
      %p206 = pnand %p204, %p205
      %p207 = pneg %p206
      // Predicated region
      $region9: #{tpu_custom_call.1} parent=5 // pred_check
        _
      $region10: #{tpu_custom_call.1} parent=5 // pred_check_branch
        %209 = sbr.rel (%p206) target = $region12
      $region11: #{tpu_custom_call.1} parent=5 // pred_region
        %s210 = ssub.s32 %s18, 1
        // Predicated region
        $region13: #{tpu_custom_call.1} parent=11 // pred_check
          %p211 = pneg %p65
        $region14: #{tpu_custom_call.1} parent=11 // pred_check_branch
          %213 = sbr.rel (%p211) target = $region16
        $region15: #{tpu_custom_call.1} parent=11 // pred_region
          _
        $region16: #{tpu_custom_call.1} parent=11 // pred_fallthru
          _
        // Predicated region
        $region17: #{tpu_custom_call.1} parent=11 // pred_check
          %p214 = pneg %p86
        $region18: #{tpu_custom_call.1} parent=11 // pred_check_branch
          %216 = sbr.rel (%p214) target = $region20
        $region19: #{tpu_custom_call.1} parent=11 // pred_region
          _
        $region20: #{tpu_custom_call.1} parent=11 // pred_fallthru
          _
        // Predicated region
        $region21: #{tpu_custom_call.1} parent=11 // pred_check
          %p217 = pneg %p107
        $region22: #{tpu_custom_call.1} parent=11 // pred_check_branch
          %219 = sbr.rel (%p217) target = $region24
        $region23: #{tpu_custom_call.1} parent=11 // pred_region
          _
        $region24: #{tpu_custom_call.1} parent=11 // pred_fallthru
          _
        // Predicated region
        $region25: #{tpu_custom_call.1} parent=11 // pred_check
          %p220 = pneg %p128
        $region26: #{tpu_custom_call.1} parent=11 // pred_check_branch
          %222 = sbr.rel (%p220) target = $region28
        $region27: #{tpu_custom_call.1} parent=11 // pred_region
          _
        $region28: #{tpu_custom_call.1} parent=11 // pred_fallthru
          _
        // Predicated region
        $region29: #{tpu_custom_call.1} parent=11 // pred_check
          %p223 = pneg %p149
        $region30: #{tpu_custom_call.1} parent=11 // pred_check_branch
          %225 = sbr.rel (%p223) target = $region32
        $region31: #{tpu_custom_call.1} parent=11 // pred_region
          _
        $region32: #{tpu_custom_call.1} parent=11 // pred_fallthru
          _
        // Predicated region
        $region33: #{tpu_custom_call.1} parent=11 // pred_check
          %p226 = pneg %p170
        $region34: #{tpu_custom_call.1} parent=11 // pred_check_branch
          %228 = sbr.rel (%p226) target = $region36
        $region35: #{tpu_custom_call.1} parent=11 // pred_region
          _
        $region36: #{tpu_custom_call.1} parent=11 // pred_fallthru
          _
      $region12: #{tpu_custom_call.1} parent=5 // pred_fallthru
        _
      %p229 = scmp.lt.s32.totalorder %s18, 2
      // Predicated region
      $region37: #{tpu_custom_call.1} parent=5 // pred_check
        %p230 = pneg %p229
      $region38: #{tpu_custom_call.1} parent=5 // pred_check_branch
        %232 = sbr.rel (%p230) target = $region40
      $region39: #{tpu_custom_call.1} parent=5 // pred_region
        // Predicated region
        $region41: #{tpu_custom_call.1} parent=39 // pred_check
          %p233 = pneg %p38
        $region42: #{tpu_custom_call.1} parent=39 // pred_check_branch
          %235 = sbr.rel (%p233) target = $region44
        $region43: #{tpu_custom_call.1} parent=39 // pred_region
          %p236 = scmp.lt.s32.totalorder %s18, 1
          %s237 = scalar_select %p236, %s18, 1
          %s238 = smul.addr %s237, 2
          %s239 = smul.addr %s238, 4
          %s240 = scalar_lea.vmem %s0, %s239
        $region44: #{tpu_custom_call.1} parent=39 // pred_fallthru
          _
      $region40: #{tpu_custom_call.1} parent=5 // pred_fallthru
        _
      %p241 = scmp.le.s32.totalorder 1, %s18
      %p242 = scmp.lt.s32.totalorder %s18, 3
      %p243 = pnand %p241, %p242
      %p244 = pneg %p243
      // Predicated region
      $region45: #{tpu_custom_call.1} parent=5 // pred_check
        _
      $region46: #{tpu_custom_call.1} parent=5 // pred_check_branch
        %246 = sbr.rel (%p243) target = $region48
      $region47: #{tpu_custom_call.1} parent=5 // pred_region
        %s247 = ssub.s32 %s18, 1
        %p248 = scmp.lt.s32.totalorder %s23, 1
        %s249 = scalar_select %p248, %s23, 1
        %s250 = smul.addr %s249, 2
        %s251 = smul.addr %s250, 4
        %s252 = scalar_lea.vmem %s0, %s251
        %p253 = pneg %p44
        %p254 = pneg %p41
        %p255 = pneg %p65
        %p256 = pneg %p62
        %p257 = pneg %p86
        %p258 = pneg %p83
        %p259 = pneg %p107
        %p260 = pneg %p104
        %p261 = pneg %p128
        %p262 = pneg %p125
        %p263 = pneg %p149
        %p264 = pneg %p146
        %p265 = pneg %p170
        %p266 = pneg %p167
        %p267 = pneg %p196
        %p268 = pneg %p193
        %s269 = sand.u32 %s183, 1
        %s270 = scalar_lea.sflag [#allocation4], %s269
        %s271 = sand.u32 %s183, 1
        %s272 = smul.addr %s271, 8
        %s273 = scalar_lea.vmem [#allocation3], %s272
        %p274 = scmp.lt.s32.totalorder %s23, 1
        %s275 = scalar_select %p274, %s23, 1
        %s276 = smul.addr %s275, 2
        %s277 = smul.addr %s276, 4
        %s278 = scalar_lea.vmem %s0, %s277
        %v279 = vld [vmem:[%s278] sm:$0xff]
        %v281 = vcombine.high %v279, %v279
        %vm283 = vcmask 1043456
        %v284 = vsel %vm283, %v279, 0.0
        %v285 = vsel %vm283, %v281, 0.0
        %v286 = vadd.f32 %v284, %v285
        %287 = vadd.xlane.f32.xlu0 %v286
        %v288 = vpop.xlane.xlu0 %287
        %v289 = vld [vmem:[%s1] sm:$0xf]
        %v290 = vmul.f32 %v289, %v288
        %vm291 = vcmask 11264
        %v292 = vsel %vm291, %v290, 0.0
        %v293 = vrot.slane %v292, 4
        %v294 = vadd.f32 %v292, %v293
        %v295 = vrot.slane %v294, 2
        %v296 = vadd.f32 %v294, %v295
        %v297 = vrot.slane %v296, 1
        %v298 = vadd.f32 %v296, %v297
        %v299 = vld [vmem:[%s2] sm:$0x1]
        %v300 = vadd.f32 %v298, %v299
        %v301 = vmax.f32 %v300, 0.0
        %v302 = vld [vmem:[%s3] sm:$0xf]
        %v303 = vlaneseq
        %v304 = vshrl.u32 %v303, 7
        %v305 = vsub.s32 0, %v304
        %v306 = vrot.slane %v301, %v305
        %v307 = vmul.f32 %v302, %v306
        %v308 = vsel %vm291, %v307, 0.0
        %309 = vadd.xlane.f32.xlu0 %v308
        %v310 = vpop.xlane.xlu0 %309
        %v311 = vld [vmem:[%s4] sm:$0xf]
        %v312 = vadd.f32 %v310, %v311
        %v313 = vxor.u32 %v312, 2147483648
        %v314 = vmul.f32 %v313, 1.442695
        %v315 = vpow.pop %v314
        %v316 = vadd.f32 %v315, 1.0
        %v317 = vrcp.pop %v316
        %v318 = vmul.f32 1.0, %v317
        %v319 = vld [vmem:[%s5] sm:$0xf]
        %v320 = vmul.f32 %v319, %v318
        %322 = vset.pattern.permute.xlu0 0
        %323 = vperm.xlu0 %322, %v320
        %v324 = vpop.permute.xlu0 %323
        %v326 = vmul.f32 %v324, %v279
        %v327 = vmul.f32 %v324, %v281
        %v328 = vsel %vm283, %v326, 0.0
        %v329 = vrot.slane %v328, 4
        %v330 = vadd.f32 %v328, %v329
        %v331 = vrot.slane %v330, 2
        %v332 = vadd.f32 %v330, %v331
        %v333 = vrot.slane %v332, 1
        %v334 = vadd.f32 %v332, %v333
        %v335 = vsel %vm283, %v327, 0.0
        %v336 = vrot.slane %v335, 4
        %v337 = vadd.f32 %v335, %v336
        %v338 = vrot.slane %v337, 2
        %v339 = vadd.f32 %v337, %v338
        %v340 = vrot.slane %v339, 1
        %v341 = vadd.f32 %v339, %v340
        %v342 = vld [vmem:[#allocation2] sm:$0x1]
        %344 = vset.pattern.permute.xlu0 0
        %345 = vperm.xlu0 %344, %v342
        %v346 = vpop.permute.xlu0 %345
        %v348 = vlaneseq
        %v349 = vshrl.u32 %v348, 7
        %v350 = vsub.s32 0, %v349
        %v351 = vrot.slane %v346, %v350
        %v352 = vadd.f32 %v334, %v351
        %v353 = vadd.f32 %v341, %v351
        %v354 = vxor.u32 %v352, 2147483648
        %v355 = vxor.u32 %v353, 2147483648
        %v356 = vmul.f32 %v354, 1.442695
        %v357 = vpow.pop %v356
        %v358 = vmul.f32 %v355, 1.442695
        %v359 = vpow.pop %v358
        %v360 = vadd.f32 %v357, 1.0
        %v361 = vadd.f32 %v359, 1.0
        %v362 = vrcp.pop %v360
        %v363 = vmul.f32 1.0, %v362
        %v364 = vrcp.pop %v361
        %v365 = vmul.f32 1.0, %v364
        %367 = vset.pattern.permute.xlu0 0
        %368 = vperm.xlu0 %367, %v318
        %v369 = vpop.permute.xlu0 %368
        %v371 = vunpack.c.l.s4 839922192
        %v372 = vunpack.c.0.s8 %v371
        %v373 = vlaneseq
        %v374 = vshrl.u32 %v373, 7
        %v375 = vsub.s32 %v372, %v374
        %v376 = vrot.slane %v369, %v375
        %v378 = vmul.f32 %v279, %v376
        %v381 = vcombine.low %v363, %v365
        %v383 = vmul.f32 %v279, %v381
        %v384 = vmax.f32 %v378, %v383
        %385 = vst [vmem:[%s273] sm:$0xff] %v384
        %s386 = sand.u32 %s183, 1
        %s387 = scalar_lea.sflag [#allocation4], %s386
        %s388 = sand.u32 %s183, 1
        %s389 = smul.addr %s388, 8
        %s390 = scalar_lea.vmem [#allocation3], %s389
        // Predicated region
        $region49: #{tpu_custom_call.1} parent=47 // pred_check
          %p391 = pneg %p193
        $region50: #{tpu_custom_call.1} parent=47 // pred_check_branch
          %393 = sbr.rel (%p391) target = $region52
        $region51: #{tpu_custom_call.1} parent=47 // pred_region
          %s395 = ssub.s32 128, 128
          %396 = vsyncadd %s387, %s395
          %s397 = smul.addr %s23, 2
          %s398 = smul.addr %s397, 64
          %s399 = scalar_lea.hbm %s7, %s398
          %s401 = sshll.u32 %s390, 4
          %s402 = int_to_ptr.vmem [resolvable:$true] %s401
          %404 = dma.vmem_to_hbm [thread:$0]  %s402, 128, %s399, %s387
        $region52: #{tpu_custom_call.1} parent=47 // pred_fallthru
          _
      $region48: #{tpu_custom_call.1} parent=5 // pred_fallthru
        _
      %p405 = scmp.le.s32.totalorder 2, %s18
      // Predicated region
      $region53: #{tpu_custom_call.1} parent=5 // pred_check
        %p406 = pneg %p405
      $region54: #{tpu_custom_call.1} parent=5 // pred_check_branch
        %408 = sbr.rel (%p406) target = $region56
      $region55: #{tpu_custom_call.1} parent=5 // pred_region
        %s409 = ssub.s32 %s18, 2
        // Predicated region
        $region57: #{tpu_custom_call.1} parent=55 // pred_check
          %p410 = pneg %p199
        $region58: #{tpu_custom_call.1} parent=55 // pred_check_branch
          %412 = sbr.rel (%p410) target = $region60
        $region59: #{tpu_custom_call.1} parent=55 // pred_region
          %s413 = sand.u32 %s184, 1
          %s414 = scalar_lea.sflag [#allocation4], %s413
          %s415 = sand.u32 %s184, 1
          %s416 = smul.addr %s415, 8
          %s417 = scalar_lea.vmem [#allocation3], %s416
          %418 = dma.done %s414, 128
        $region60: #{tpu_custom_call.1} parent=55 // pred_fallthru
          _
      $region56: #{tpu_custom_call.1} parent=5 // pred_fallthru
        _
    $region6: #{tpu_custom_call.1} parent=1 // loop_footer
      %s22 = sadd.s32 1, %s18
    $region7: #{tpu_custom_call.1} parent=1 // loop_footer_branch
      %17 = sbr.rel target = $region3
    $region8: #{tpu_custom_call.1} parent=1 // loop_exit
      _
    %419 = vsyncpa [#allocation4], 1
    %s420 = scalar_lea.sflag [#allocation4], 1
    %421 = vsyncpa %s420, 1

</llo_original>
